<compile_context>
chip_gen: v7x
topology: tpu7x:2x2x1
jax: 0.10.0
libtpu: 0.0.40
codegen_flags: <defaults>
</compile_context>

<pallas_src>
import jax
import jax.numpy as jnp
from jax.experimental import pallas as pl
from jax.experimental.pallas import tpu as pltpu

LANES = 128  # lane-dense slab width


# ----------------------------------------------------------------------------
# Kernel
# ----------------------------------------------------------------------------
def _linear_pbeg_kernel(x_ref, w_ref, b_emb_ref, w_cls_ref, b_cls_ref, out_ref):
    f32 = jnp.float32

    # Folded linear chain (kp ++ bbox already concatenated on the host).
    # Padded emb lanes [E, 128) are exactly 0 (zero weight columns, zero bias).
    emb = jnp.dot(x_ref[...], w_ref[...], preferred_element_type=f32) + b_emb_ref[...]

    # Classifier + Softmax(dim=-1). The classifier weights/bias are host-shifted
    # so the real class logits live in lanes [E, E+C); every other lane carries
    # a -1e30 bias and therefore contributes exp(...) == 0 to the softmax.
    # NOTE: this masking relies on (a) the logits/softmax path staying f32 and
    # (b) the padded emb lanes staying exactly zero — keep both invariants.
    logits = (jnp.dot(emb.astype(w_cls_ref.dtype), w_cls_ref[...],
                      preferred_element_type=f32) + b_cls_ref[...])
    m = jnp.max(logits, axis=-1, keepdims=True)
    e = jnp.exp(logits - m)                                   # exactly 0 on masked lanes
    inv = pl.reciprocal(jnp.sum(e, axis=-1, keepdims=True))   # exact reciprocal (EUP)
    ids = e * inv

    # Pack both results into ONE slab: emb occupies lanes [0, E), ids occupies
    # lanes [E, E+C), every other lane is 0 -> a plain add composes them.
    out_ref[...] = (emb + ids).astype(out_ref.dtype)


# ----------------------------------------------------------------------------
# Wrapper
# ----------------------------------------------------------------------------
def linear_pbeg_forward(kp, bbox, params, *, batch_tile=1024):
    """kp: [B, J, j_dim] f32, bbox: [B, 4] f32 (already in target bbox format).

    Returns (embeddings [B, E] f32, ids [B, C] f32 softmax probabilities).
    """
    # TODO(synk): ConvertBoundingBoxFormat (bbox_format) is a pure coordinate
    # re-parameterisation outside the NN hot path; bbox is assumed converted.
    # TODO(synk): the `embedding_key_exists(ds)` early-return is a cache lookup
    # on the State container and has no kernel equivalent.
    B, J, j_dim = kp.shape
    D_kp = J * j_dim
    D_in = D_kp + 4
    C, E = params["cls_w"].shape
    assert E + C <= LANES, "packed output layout requires E + C <= 128 lanes"

    # ---- host-side algebraic folding of the activation-free Linear chain ----
    W = params["model_w"][0].T.astype(jnp.float32)            # [D_in, h1]
    b = params["model_b"][0].astype(jnp.float32)
    for w_i, b_i in zip(params["model_w"][1:], params["model_b"][1:]):
        A = w_i.T.astype(jnp.float32)
        W = W @ A
        b = b @ A + b_i.astype(jnp.float32)
    # W: [D_in, E] (kp + bbox columns folded together), b: [E]

    # ---- lane-dense (128-wide) slabs; matmul operands bf16, biases f32 ----
    w_p = (jnp.zeros((D_in, LANES), jnp.float32)
           .at[:, :E].set(W)).astype(jnp.bfloat16)                         # [D_in,128]
    b_emb_p = jnp.zeros((1, LANES), jnp.float32).at[0, :E].set(b)          # [1,128]
    w_cls = params["cls_w"].T.astype(jnp.float32)                          # [E, C]
    # Shift class columns to lanes [E, E+C) so emb and ids pack into one slab.
    w_cls_p = (jnp.zeros((LANES, LANES), jnp.float32)
               .at[:E, E:E + C].set(w_cls)).astype(jnp.bfloat16)           # [128,128]
    b_cls_p = (jnp.full((1, LANES), -1e30, jnp.float32)
               .at[0, E:E + C].set(params["cls_b"].astype(jnp.float32)))   # [1,128]

    # ---- fused input: kp_flat ++ bbox in one [B, D_in] bf16 array ----
    x = jnp.concatenate([kp.reshape(B, D_kp), bbox], axis=-1).astype(jnp.bfloat16)

    # ---- batch tiling (grid over B, weights resident across the grid) ----
    # Cap the tile so the double-buffered f32 output slab stays well inside
    # v5e's 16 MiB default scoped VMEM (2 bufs * 4096 * 128 * 4B = 4 MiB).
    batch_tile = min(int(batch_tile), 4096)
    B8 = -(-B // 8) * 8
    TB = min(batch_tile, B8)
    if B8 >= 16:
        # Keep >= 2 grid steps when the batch allows so the "parallel" axis can
        # shard across v7x's two TensorCores (grid=(1,) idles half the chip).
        TB = min(TB, max(8, (B8 // 2) // 8 * 8))
    B_pad = -(-B // TB) * TB
    if B_pad != B:
        x = jnp.pad(x, ((0, B_pad - B), (0, 0)))
    grid = (B_pad // TB,)

    def resident(a):  # same block every grid step -> stays VMEM-resident
        return pl.BlockSpec(a.shape, lambda i: (0,) * a.ndim)

    in_specs = [
        pl.BlockSpec((TB, D_in), lambda i: (i, 0)),   # fused kp++bbox rows
        resident(w_p), resident(b_emb_p),
        resident(w_cls_p), resident(b_cls_p),
    ]
    out_specs = pl.BlockSpec((TB, LANES), lambda i: (i, 0))
    out_shape = jax.ShapeDtypeStruct((B_pad, LANES), jnp.float32)

    flops = 2 * B_pad * (D_in * LANES + LANES * LANES)
    bytes_accessed = (x.size * 2
                      + (w_p.size + w_cls_p.size) * 2
                      + (b_emb_p.size + b_cls_p.size) * 4
                      + B_pad * LANES * 4)
    cost = pl.CostEstimate(flops=flops,
                           transcendentals=B_pad * (LANES + 1),
                           bytes_accessed=bytes_accessed)

    out = pl.pallas_call(
        _linear_pbeg_kernel,
        out_shape=out_shape,
        grid=grid,
        in_specs=in_specs,
        out_specs=out_specs,
        compiler_params=pltpu.CompilerParams(
            dimension_semantics=("parallel",)),
        cost_estimate=cost,
    )(x, w_p, b_emb_p, w_cls_p, b_cls_p)

    # Unpack the single slab: emb in lanes [0, E), ids in lanes [E, E+C).
    return out[:B, :E], out[:B, E:E + C]


# ----------------------------------------------------------------------------
# Synthetic params (PyTorch Linear layout: weight = [out, in]) + f32 reference
# ----------------------------------------------------------------------------
def init_params(key, J, j_dim, hidden_layers, E, C):
    sizes = [J * j_dim + 4] + ([] if not hidden_layers else list(hidden_layers)) + [E]
    n_lin = len(sizes) - 1
    ks = jax.random.split(key, 2 * n_lin + 2)

    def u(k, shape, scale=0.1):
        return jax.random.uniform(k, shape, jnp.float32, -scale, scale)

    model_w = [u(ks[2 * i], (sizes[i + 1], sizes[i])) for i in range(n_lin)]
    model_b = [u(ks[2 * i + 1], (sizes[i + 1],)) for i in range(n_lin)]
    return dict(model_w=model_w, model_b=model_b,
                cls_w=u(ks[-2], (C, E)), cls_b=u(ks[-1], (C,)))


def reference_forward(kp, bbox, params):
    data = jnp.concatenate([kp.reshape(kp.shape[0], -1), bbox], axis=-1)
    h = data
    for w, b in zip(params["model_w"], params["model_b"]):
        h = h @ w.T + b
    emb = h
    logits = emb @ params["cls_w"].T + params["cls_b"]
    return emb, jax.nn.softmax(logits, axis=-1)


# ----------------------------------------------------------------------------
if __name__ == "__main__":
    B = 8
    J, j_dim = 17, 2         # COCO joint_shape
    hidden_layers = [32]     # one hidden Linear layer
    E = 16                   # embedding_size
    C = 10                   # nof_classes

    key = jax.random.PRNGKey(0)
    k_kp, k_bb, k_p = jax.random.split(key, 3)
    kp = jax.random.normal(k_kp, (B, J, j_dim), jnp.float32)
    bbox = jax.random.uniform(k_bb, (B, 4), jnp.float32, 0.0, 1.0)
    params = init_params(k_p, J, j_dim, hidden_layers, E, C)

    emb, ids = linear_pbeg_forward(kp, bbox, params)
    jax.block_until_ready((emb, ids))

    assert emb.shape == (B, E) and ids.shape == (B, C)
    assert bool(jnp.all(jnp.isfinite(emb))) and bool(jnp.all(jnp.isfinite(ids)))
    # softmax rows sum to ~1 (exact reciprocal -> tight tolerance)
    assert bool(jnp.allclose(jnp.sum(ids, axis=-1), 1.0, atol=1e-3))

    # f32 pure-JAX reference (unfolded chain); bf16 matmul operands => loose tol
    emb_ref, ids_ref = reference_forward(kp, bbox, params)
    assert bool(jnp.allclose(emb, emb_ref, atol=5e-2, rtol=5e-2))
    assert bool(jnp.allclose(ids, ids_ref, atol=5e-2, rtol=5e-2))

    print("KERNEL_OK")
</pallas_src>

<mosaic_0001>
module attributes {stable_mosaic.version = 11 : i64} {
  func.func @_linear_pbeg_kernel(%arg0: i32, %arg1: memref<8x38xbf16, #tpu.memory_space<vmem>>, %arg2: memref<38x128xbf16, #tpu.memory_space<vmem>>, %arg3: memref<1x128xf32, #tpu.memory_space<vmem>>, %arg4: memref<128x128xbf16, #tpu.memory_space<vmem>>, %arg5: memref<1x128xf32, #tpu.memory_space<vmem>>, %arg6: memref<8x128xf32, #tpu.memory_space<vmem>>) attributes {dimension_semantics = [#tpu.dimension_semantics<parallel>], iteration_bounds = array<i64: 1>, scalar_prefetch = 0 : i64, scratch_operands = 0 : i64, tpu.core_type = #tpu.core_type<tc>, window_params = [{transform_indices = @transform_0, window_bounds = array<i64: 8, 38>}, {pipeline_mode = #tpu.pipeline_mode<synchronous>, transform_indices = @transform_1, window_bounds = array<i64: 38, 128>}, {pipeline_mode = #tpu.pipeline_mode<synchronous>, transform_indices = @transform_2, window_bounds = array<i64: 1, 128>}, {pipeline_mode = #tpu.pipeline_mode<synchronous>, transform_indices = @transform_3, window_bounds = array<i64: 128, 128>}, {pipeline_mode = #tpu.pipeline_mode<synchronous>, transform_indices = @transform_4, window_bounds = array<i64: 1, 128>}, {transform_indices = @transform_5, window_bounds = array<i64: 8, 128>}]} {
    %c0 = arith.constant 0 : index
    %c0_0 = arith.constant 0 : index
    %0 = vector.load %arg1[%c0, %c0_0] : memref<8x38xbf16, #tpu.memory_space<vmem>>, vector<8x38xbf16>
    %c0_1 = arith.constant 0 : index
    %c0_2 = arith.constant 0 : index
    %1 = vector.load %arg2[%c0_1, %c0_2] : memref<38x128xbf16, #tpu.memory_space<vmem>>, vector<38x128xbf16>
    %cst = arith.constant dense<0.000000e+00> : vector<8x128xf32>
    %2 = tpu.matmul %0, %1, %cst {dimension_numbers = #tpu.dot_dimension_numbers<[1], [0], [0], [1], [0, 0, 1, 1], [], []>} : vector<8x38xbf16>, vector<38x128xbf16>, vector<8x128xf32> -> vector<8x128xf32>
    %c0_3 = arith.constant 0 : index
    %c0_4 = arith.constant 0 : index
    %3 = vector.load %arg3[%c0_3, %c0_4] : memref<1x128xf32, #tpu.memory_space<vmem>>, vector<1x128xf32>
    %4 = vector.broadcast %3 : vector<1x128xf32> to vector<8x128xf32>
    %5 = arith.addf %2, %4 : vector<8x128xf32>
    %6 = arith.truncf %5 : vector<8x128xf32> to vector<8x128xbf16>
    %c0_5 = arith.constant 0 : index
    %c0_6 = arith.constant 0 : index
    %7 = vector.load %arg4[%c0_5, %c0_6] : memref<128x128xbf16, #tpu.memory_space<vmem>>, vector<128x128xbf16>
    %cst_7 = arith.constant dense<0.000000e+00> : vector<8x128xf32>
    %8 = tpu.matmul %6, %7, %cst_7 {dimension_numbers = #tpu.dot_dimension_numbers<[1], [0], [0], [1], [0, 0, 1, 1], [], []>} : vector<8x128xbf16>, vector<128x128xbf16>, vector<8x128xf32> -> vector<8x128xf32>
    %c0_8 = arith.constant 0 : index
    %c0_9 = arith.constant 0 : index
    %9 = vector.load %arg5[%c0_8, %c0_9] : memref<1x128xf32, #tpu.memory_space<vmem>>, vector<1x128xf32>
    %10 = vector.broadcast %9 : vector<1x128xf32> to vector<8x128xf32>
    %11 = arith.addf %8, %10 : vector<8x128xf32>
    %cst_10 = arith.constant dense<0xFF800000> : vector<8xf32>
    %12 = vector.multi_reduction <maximumf>, %11, %cst_10 [1] : vector<8x128xf32> to vector<8xf32>
    %13 = vector.shape_cast %12 : vector<8xf32> to vector<8x1xf32>
    %14 = vector.broadcast %13 : vector<8x1xf32> to vector<8x128xf32>
    %15 = arith.subf %11, %14 : vector<8x128xf32>
    %16 = math.exp %15 : vector<8x128xf32>
    %cst_11 = arith.constant dense<0.000000e+00> : vector<8xf32>
    %17 = vector.multi_reduction <add>, %16, %cst_11 [1] : vector<8x128xf32> to vector<8xf32>
    %18 = vector.shape_cast %17 : vector<8xf32> to vector<8x1xf32>
    %19 = tpu.reciprocal %18 : vector<8x1xf32> -> vector<8x1xf32>
    %20 = vector.broadcast %19 : vector<8x1xf32> to vector<8x128xf32>
    %21 = arith.mulf %16, %20 : vector<8x128xf32>
    %22 = arith.addf %5, %21 : vector<8x128xf32>
    %c0_12 = arith.constant 0 : index
    %c0_13 = arith.constant 0 : index
    %23 = vector.load %arg6[%c0_12, %c0_13] : memref<8x128xf32, #tpu.memory_space<vmem>>, vector<8x128xf32>
    tpu.vector_store %arg6[%c0_12, %c0_13], %22 {strides = array<i32>} : memref<8x128xf32, #tpu.memory_space<vmem>>, vector<8x128xf32>,
    return
  }
  func.func @transform_0(%arg0: i32) -> (i32, i32) {
    %c0_i32 = arith.constant 0 : i32
    %c0_i32_0 = arith.constant 0 : i32
    return %arg0, %c0_i32 : i32, i32
  }
  func.func @transform_1(%arg0: i32) -> (i32, i32) {
    %c0_i32 = arith.constant 0 : i32
    %c0_i32_0 = arith.constant 0 : i32
    %c0_i32_1 = arith.constant 0 : i32
    return %c0_i32, %c0_i32_0 : i32, i32
  }
  func.func @transform_2(%arg0: i32) -> (i32, i32) {
    %c0_i32 = arith.constant 0 : i32
    %c0_i32_0 = arith.constant 0 : i32
    %c0_i32_1 = arith.constant 0 : i32
    return %c0_i32, %c0_i32_0 : i32, i32
  }
  func.func @transform_3(%arg0: i32) -> (i32, i32) {
    %c0_i32 = arith.constant 0 : i32
    %c0_i32_0 = arith.constant 0 : i32
    %c0_i32_1 = arith.constant 0 : i32
    return %c0_i32, %c0_i32_0 : i32, i32
  }
  func.func @transform_4(%arg0: i32) -> (i32, i32) {
    %c0_i32 = arith.constant 0 : i32
    %c0_i32_0 = arith.constant 0 : i32
    %c0_i32_1 = arith.constant 0 : i32
    return %c0_i32, %c0_i32_0 : i32, i32
  }
  func.func @transform_5(%arg0: i32) -> (i32, i32) {
    %c0_i32 = arith.constant 0 : i32
    %c0_i32_0 = arith.constant 0 : i32
    return %arg0, %c0_i32 : i32, i32
  }
}

</mosaic_0001>

<llo_original>
// kernel: tpu_custom_call.1
$region0: #{tpu_custom_call.1}
  #allocation0 [shape = 'u32[]', space=smem, size = 0x4, offset = 0x4, fixed_abs, tag = 'smem constant byte address 0x4 - core index']
  #allocation1 [shape = 'u32[144,128]{1,0:T(1,128)}', space=vmem, size = 0x12000, scoped, tag = 'internal scratch']
  %s0 = inlined_call_operand.hbm [shape: bf16[8,38], index: 0, kind: input, shape index: {}]
  %s1 = inlined_call_operand.hbm [shape: bf16[38,128], index: 1, kind: input, shape index: {}]
  %s2 = inlined_call_operand.vmem [shape: f32[1,128], index: 2, kind: input, shape index: {}]
  %s3 = inlined_call_operand.hbm [shape: bf16[128,128], index: 3, kind: input, shape index: {}]
  %s4 = inlined_call_operand.vmem [shape: f32[1,128], index: 4, kind: input, shape index: {}]
  %s5 = inlined_call_operand.hbm [shape: f32[8,128], index: 5, kind: output, shape index: {}]
  %s6 = sld [smem:[#allocation0]]
  $region42: #{tpu_custom_call.1} parent=0
    _
  %s8 = ssub.s32 1, %s6
  %s9 = scalar_select 0, %s8, %s6
  $region1: #{tpu_custom_call.1} parent=0
    #allocation2 [shape = 'u8[2048]{0}', space=vmem, size = 0x800, scoped, tag = 'input window, operand 0, single buffered']
    #allocation3 [shape = 's32[1]{0}', space=sflag, size = 0x4, scoped, tag = 'scoped memory for tpu_custom_call.1']
    #allocation4 [shape = 's32[1]{0}', space=sflag, size = 0x4, scoped, tag = 'scoped memory for tpu_custom_call.1']
    #allocation5 [shape = 'u8[10240]{0}', space=vmem, size = 0x2800, scoped, tag = 'input window, operand 1, single buffered']
    #allocation6 [shape = 's32[1]{0}', space=sflag, size = 0x4, scoped, tag = 'scoped memory for tpu_custom_call.1']
    #allocation7 [shape = 'u8[32768]{0}', space=vmem, size = 0x8000, scoped, tag = 'input window, operand 3, single buffered']
    #allocation8 [shape = 'u8[4096]{0}', space=vmem, size = 0x1000, scoped, tag = 'output window, operand 0, single buffered']
    %10 = vsyncpa [#allocation3], 0
    %11 = vsyncpa [#allocation6], 0
    %12 = vsyncpa [#allocation4], 0
    // Predicated region
    $region2: #{tpu_custom_call.1} parent=1 // pred_check
      _
    $region3: #{tpu_custom_call.1} parent=1 // pred_check_branch
      %14 = sbr.rel (0) target = $region5
    $region4: #{tpu_custom_call.1} parent=1 // pred_region
      %s16 = ssub.s32 64, 64
      %17 = vsyncadd [#allocation3], %s16
      %s19 = sshll.u32 [#allocation2], 4
      %s20 = int_to_ptr.vmem [resolvable:$true] %s19
      %22 = dma.hbm_to_vmem [thread:$0]  %s0, 64, %s20, [#allocation3]
    $region5: #{tpu_custom_call.1} parent=1 // pred_fallthru
      _
    // Predicated region
    $region6: #{tpu_custom_call.1} parent=1 // pred_check
      _
    $region7: #{tpu_custom_call.1} parent=1 // pred_check_branch
      %24 = sbr.rel (0) target = $region9
    $region8: #{tpu_custom_call.1} parent=1 // pred_region
      %s26 = ssub.s32 320, 320
      %27 = vsyncadd [#allocation6], %s26
      %s28 = sshll.u32 [#allocation5], 4
      %s29 = int_to_ptr.vmem [resolvable:$true] %s28
      %34 = dma.hbm_to_vmem [thread:$0]  %s1, 320, %s29, [#allocation6], 64, 64, 4
    $region9: #{tpu_custom_call.1} parent=1 // pred_fallthru
      _
    // Predicated region
    $region10: #{tpu_custom_call.1} parent=1 // pred_check
      _
    $region11: #{tpu_custom_call.1} parent=1 // pred_check_branch
      %36 = sbr.rel (0) target = $region13
    $region12: #{tpu_custom_call.1} parent=1 // pred_region
      _
    $region13: #{tpu_custom_call.1} parent=1 // pred_fallthru
      _
    // Predicated region
    $region14: #{tpu_custom_call.1} parent=1 // pred_check
      _
    $region15: #{tpu_custom_call.1} parent=1 // pred_check_branch
      %38 = sbr.rel (0) target = $region17
    $region16: #{tpu_custom_call.1} parent=1 // pred_region
      %s40 = ssub.s32 1024, 1024
      %41 = vsyncadd [#allocation6], %s40
      %s42 = sshll.u32 [#allocation7], 4
      %s43 = int_to_ptr.vmem [resolvable:$true] %s42
      %48 = dma.hbm_to_vmem [thread:$0]  %s3, 1024, %s43, [#allocation6], 64, 64, 4
    $region17: #{tpu_custom_call.1} parent=1 // pred_fallthru
      _
    // Predicated region
    $region18: #{tpu_custom_call.1} parent=1 // pred_check
      _
    $region19: #{tpu_custom_call.1} parent=1 // pred_check_branch
      %50 = sbr.rel (0) target = $region21
    $region20: #{tpu_custom_call.1} parent=1 // pred_region
      _
    $region21: #{tpu_custom_call.1} parent=1 // pred_fallthru
      _
    // Predicated region
    $region22: #{tpu_custom_call.1} parent=1 // pred_check
      _
    $region23: #{tpu_custom_call.1} parent=1 // pred_check_branch
      %52 = sbr.rel (0) target = $region25
    $region24: #{tpu_custom_call.1} parent=1 // pred_region
      %53 = dma.done [#allocation3], 64
    $region25: #{tpu_custom_call.1} parent=1 // pred_fallthru
      _
    // Predicated region
    $region26: #{tpu_custom_call.1} parent=1 // pred_check
      _
    $region27: #{tpu_custom_call.1} parent=1 // pred_check_branch
      %55 = sbr.rel (0) target = $region29
    $region28: #{tpu_custom_call.1} parent=1 // pred_region
      %56 = dma.done [#allocation6], 320
    $region29: #{tpu_custom_call.1} parent=1 // pred_fallthru
      _
    // Predicated region
    $region30: #{tpu_custom_call.1} parent=1 // pred_check
      _
    $region31: #{tpu_custom_call.1} parent=1 // pred_check_branch
      %58 = sbr.rel (0) target = $region33
    $region32: #{tpu_custom_call.1} parent=1 // pred_region
      %59 = dma.done [#allocation6], 1024
    $region33: #{tpu_custom_call.1} parent=1 // pred_fallthru
      _
    %v61 = vld [vmem:[#allocation2] sm:$0xf]
    %v62 = vld [vmem:[#allocation5] sm:$0xf]
    %v63 = vld [vmem:[#allocation5 + $0x4] sm:$0xf]
    %v64 = vld [vmem:[#allocation5 + $0x8] sm:$0xf]
    %v65 = vld [vmem:[#allocation5 + $0xc] sm:$0xf]
    %v66 = vld [vmem:[#allocation5 + $0x10] sm:$0x7]
    %v67 = vld [vmem:[%s2] sm:$0x1]
    %v69 = vlaneseq
    %v70 = vshrl.u32 %v69, 7
    %v71 = vsub.s32 0, %v70
    %v72 = vrot.slane %v67, %v71
    %v79 = vunpack.c.l.b16 %v62
    %v80 = vunpack.c.l.b16 %v63
    %v81 = vunpack.c.l.b16 %v64
    %v82 = vunpack.c.l.b16 %v65
    %v83 = vunpack.c.l.b16 %v66
    %v84 = vpack.c.b16 %v80, %v79
    %v85 = vpack.c.b16 %v82, %v81
    %v86 = vpack.c.b16 %v83, %v83
    %vm89 = vcmask 310272
    %v91 = vsel %vm89, %v61, 0
    %vm93 = vcmask 1042432
    %v95 = vsel %vm93, %v86, 0
    %97 = vmatprep.subr.bf16.mxu0 0
    %98 = vmatpush1.bf16.msra.mxu0 %v84
    %99 = vmatprep.subr.bf16.mxu0 0
    %100 = vmatpush1.bf16.msra.mxu0 %v85
    %101 = vmatprep.subr.bf16.mxu0 0
    %102 = vmatpush1.bf16.msra.mxu0 %v95
    %103 = vmatprep.subr.bf16.mxu0 0
    %104 = vmatpush1.bf16.msra.mxu0 0
    %105 = vmatprep.subr.bf16.mxu0 0
    %106 = vmatpush1.bf16.msra.mxu0 0
    %107 = vmatprep.subr.bf16.mxu0 0
    %108 = vmatpush1.bf16.msra.mxu0 0
    %109 = vmatprep.subr.bf16.mxu0 0
    %110 = vmatpush1.bf16.msra.mxu0 0
    %111 = vmatprep.subr.bf16.mxu0 0
    %112 = vmatpush1.bf16.msra.mxu0 0
    %113 = vmatprep.subr.bf16.mxu0 0
    %114 = vmatpush1.bf16.msra.mxu0 0
    %115 = vmatprep.subr.bf16.mxu0 0
    %116 = vmatpush1.bf16.msra.mxu0 0
    %117 = vmatprep.subr.bf16.mxu0 0
    %118 = vmatpush1.bf16.msra.mxu0 0
    %119 = vmatprep.subr.bf16.mxu0 0
    %120 = vmatpush1.bf16.msra.mxu0 0
    %121 = vmatprep.subr.bf16.mxu0 0
    %122 = vmatpush1.bf16.msra.mxu0 0
    %123 = vmatprep.subr.bf16.mxu0 0
    %124 = vmatpush1.bf16.msra.mxu0 0
    %125 = vmatprep.subr.bf16.mxu0 0
    %126 = vmatpush1.bf16.msra.mxu0 0
    %127 = vmatprep.subr.bf16.mxu0 0
    %128 = vmatpush1.bf16.msra.mxu0 0
    %129 = vmatprep.mubr.bf16.mxu0 0
    %130 = vmatmul.mubr.bf16.gmra.mrb[0].mxu0 %v91
    %v131 = vpop.f32.mrb[0].mxu0
    %v132 = vadd.f32 %v72, %v131
    %v133 = vpop.f32.mrb[0].mxu0
    %v134 = vpop.f32.mrb[0].mxu0
    %v135 = vpop.f32.mrb[0].mxu0
    %136 = vdwg.mxu0
    %v137 = vpack.c.bf16 %v132, %v132
    %v138 = vld [vmem:[#allocation7] sm:$0xf]
    %v139 = vld [vmem:[#allocation7 + $0x4] sm:$0xf]
    %v140 = vld [vmem:[#allocation7 + $0x8] sm:$0xf]
    %v141 = vld [vmem:[#allocation7 + $0xc] sm:$0xf]
    %v142 = vld [vmem:[#allocation7 + $0x10] sm:$0xf]
    %v143 = vld [vmem:[#allocation7 + $0x14] sm:$0xf]
    %v144 = vld [vmem:[#allocation7 + $0x18] sm:$0xf]
    %v145 = vld [vmem:[#allocation7 + $0x1c] sm:$0xf]
    %v146 = vld [vmem:[#allocation7 + $0x20] sm:$0xf]
    %v147 = vld [vmem:[#allocation7 + $0x24] sm:$0xf]
    %v148 = vld [vmem:[#allocation7 + $0x28] sm:$0xf]
    %v149 = vld [vmem:[#allocation7 + $0x2c] sm:$0xf]
    %v150 = vld [vmem:[#allocation7 + $0x30] sm:$0xf]
    %v151 = vld [vmem:[#allocation7 + $0x34] sm:$0xf]
    %v152 = vld [vmem:[#allocation7 + $0x38] sm:$0xf]
    %v153 = vld [vmem:[#allocation7 + $0x3c] sm:$0xf]
    %v154 = vld [vmem:[%s4] sm:$0x1]
    %v156 = vlaneseq
    %v157 = vshrl.u32 %v156, 7
    %v158 = vsub.s32 0, %v157
    %v159 = vrot.slane %v154, %v158
    %v177 = vunpack.c.l.b16 %v138
    %v178 = vunpack.c.l.b16 %v139
    %v179 = vunpack.c.l.b16 %v140
    %v180 = vunpack.c.l.b16 %v141
    %v181 = vunpack.c.l.b16 %v142
    %v182 = vunpack.c.l.b16 %v143
    %v183 = vunpack.c.l.b16 %v144
    %v184 = vunpack.c.l.b16 %v145
    %v185 = vunpack.c.l.b16 %v146
    %v186 = vunpack.c.l.b16 %v147
    %v187 = vunpack.c.l.b16 %v148
    %v188 = vunpack.c.l.b16 %v149
    %v189 = vunpack.c.l.b16 %v150
    %v190 = vunpack.c.l.b16 %v151
    %v191 = vunpack.c.l.b16 %v152
    %v192 = vunpack.c.l.b16 %v153
    %v193 = vpack.c.b16 %v178, %v177
    %v194 = vpack.c.b16 %v180, %v179
    %v195 = vpack.c.b16 %v182, %v181
    %v196 = vpack.c.b16 %v184, %v183
    %v197 = vpack.c.b16 %v186, %v185
    %v198 = vpack.c.b16 %v188, %v187
    %v199 = vpack.c.b16 %v190, %v189
    %v200 = vpack.c.b16 %v192, %v191
    %209 = vmatprep.subr.bf16.mxu0 0
    %210 = vmatpush1.bf16.msra.mxu0 %v193
    %211 = vmatprep.subr.bf16.mxu0 0
    %212 = vmatpush1.bf16.msra.mxu0 %v194
    %213 = vmatprep.subr.bf16.mxu0 0
    %214 = vmatpush1.bf16.msra.mxu0 %v195
    %215 = vmatprep.subr.bf16.mxu0 0
    %216 = vmatpush1.bf16.msra.mxu0 %v196
    %217 = vmatprep.subr.bf16.mxu0 0
    %218 = vmatpush1.bf16.msra.mxu0 %v197
    %219 = vmatprep.subr.bf16.mxu0 0
    %220 = vmatpush1.bf16.msra.mxu0 %v198
    %221 = vmatprep.subr.bf16.mxu0 0
    %222 = vmatpush1.bf16.msra.mxu0 %v199
    %223 = vmatprep.subr.bf16.mxu0 0
    %224 = vmatpush1.bf16.msra.mxu0 %v200
    %225 = vmatprep.subr.bf16.mxu0 0
    %226 = vmatpush1.bf16.msra.mxu0 0
    %227 = vmatprep.subr.bf16.mxu0 0
    %228 = vmatpush1.bf16.msra.mxu0 0
    %229 = vmatprep.subr.bf16.mxu0 0
    %230 = vmatpush1.bf16.msra.mxu0 0
    %231 = vmatprep.subr.bf16.mxu0 0
    %232 = vmatpush1.bf16.msra.mxu0 0
    %233 = vmatprep.subr.bf16.mxu0 0
    %234 = vmatpush1.bf16.msra.mxu0 0
    %235 = vmatprep.subr.bf16.mxu0 0
    %236 = vmatpush1.bf16.msra.mxu0 0
    %237 = vmatprep.subr.bf16.mxu0 0
    %238 = vmatpush1.bf16.msra.mxu0 0
    %239 = vmatprep.subr.bf16.mxu0 0
    %240 = vmatpush1.bf16.msra.mxu0 0
    %241 = vmatprep.mubr.bf16.mxu0 0
    %242 = vmatmul.mubr.bf16.gmra.mrb[0].mxu0 %v137
    %v243 = vpop.f32.mrb[0].mxu0
    %v244 = vadd.f32 %v159, %v243
    %v245 = vpop.f32.mrb[0].mxu0
    %v246 = vpop.f32.mrb[0].mxu0
    %v247 = vpop.f32.mrb[0].mxu0
    %248 = vdwg.mxu0
    %249 = vmax.xlane.f32.xlu0 %v244
    %v250 = vpop.xlane.xlu0 %249
    %v251 = vsub.f32 %v244, %v250
    %v252 = vmul.f32 %v251, 1.442695
    %v253 = vpow.pop %v252
    %254 = vadd.xlane.f32.xlu0 %v253
    %v255 = vpop.xlane.xlu0 %254
    %v256 = vrcp.pop %v255
    %v257 = vmul.f32 %v253, %v256
    %v258 = vadd.f32 %v132, %v257
    %259 = vst [vmem:[#allocation8] sm:$0xff] %v258
    // Predicated region
    $region34: #{tpu_custom_call.1} parent=1 // pred_check
      _
    $region35: #{tpu_custom_call.1} parent=1 // pred_check_branch
      %261 = sbr.rel (0) target = $region37
    $region36: #{tpu_custom_call.1} parent=1 // pred_region
      %s263 = ssub.s32 128, 128
      %264 = vsyncadd [#allocation4], %s263
      %s266 = sshll.u32 [#allocation8], 4
      %s267 = int_to_ptr.vmem [resolvable:$true] %s266
      %269 = dma.vmem_to_hbm [thread:$0]  %s267, 128, %s5, [#allocation4]
    $region37: #{tpu_custom_call.1} parent=1 // pred_fallthru
      _
    // Predicated region
    $region38: #{tpu_custom_call.1} parent=1 // pred_check
      _
    $region39: #{tpu_custom_call.1} parent=1 // pred_check_branch
      %271 = sbr.rel (0) target = $region41
    $region40: #{tpu_custom_call.1} parent=1 // pred_region
      %272 = dma.done [#allocation4], 128
    $region41: #{tpu_custom_call.1} parent=1 // pred_fallthru
      _
    %273 = vsyncpa [#allocation3], 1
    %274 = vsyncpa [#allocation6], 1
    %275 = vsyncpa [#allocation4], 1

</llo_original>
